<compile_context>
chip_gen: v6e
topology: v6e:2x2x1
jax: 0.10.0
libtpu: 0.0.40
codegen_flags: <defaults>
</compile_context>

<pallas_src>
import functools

import jax
import jax.numpy as jnp
from jax import lax
from jax.experimental import pallas as pl
from jax.experimental.pallas import tpu as pltpu


_NEG_SENTINEL = -1e30                    # finite "-inf": keeps fully-masked rows NaN-free
_VMEM_TILE_BUDGET = 20 * 1024 * 1024     # conservative per-step working set (fits v7x)
_VMEM_LIMIT_BYTES = 32 * 1024 * 1024     # raises v5e's 16 MiB default; == v6e/v7x default


def _round_up(x, m):
    return ((x + m - 1) // m) * m


def _tile_vmem_bytes(tq, tk, dk, dv_p, out_bytes, has_mask):
    """Rough per-grid-step VMEM working-set estimate (double-buffered pipeline)."""
    bpe = 2                                  # bf16 MXU operands
    b = 2 * tk * dk * bpe                    # k tile (x2 buffers)
    b += 2 * tk * dv_p * bpe                 # v tile
    b += 2 * tq * dk * bpe                   # q tile
    b += 2 * tq * dv_p * out_bytes           # output tile
    if has_mask:
        b += 2 * tq * tk                     # int8 mask tile
    b += tq * dv_p * 4 + 2 * tq * 4          # acc + m + l scratch
    b += 2 * tq * tk * 4                     # f32 score / prob intermediates
    return b


def _attn_tile_update(s, v_tile, o_ref, m_sc, l_sc, acc_sc):
    """Online-softmax update for one (tq, tk) score tile `s` (f32, pre-masked)."""
    kv_idx = pl.program_id(2)

    @pl.when(kv_idx == 0)
    def _():
        m_sc[...] = jnp.full_like(m_sc, -jnp.inf)
        l_sc[...] = jnp.zeros_like(l_sc)
        acc_sc[...] = jnp.zeros_like(acc_sc)

    m_prev = m_sc[...]
    m_new = jnp.maximum(m_prev, jnp.max(s, axis=-1, keepdims=True))
    alpha = jnp.exp(m_prev - m_new)                       # EUP, f32
    p = jnp.exp(s - m_new)                                # EUP, f32
    l_sc[...] = alpha * l_sc[...] + jnp.sum(p, axis=-1, keepdims=True)
    # PV matmul in bf16 (v_tile is bf16), f32 accumulation.
    acc_sc[...] = alpha * acc_sc[...] + jnp.dot(
        p.astype(v_tile.dtype), v_tile, preferred_element_type=jnp.float32)
    m_sc[...] = m_new

    @pl.when(kv_idx == pl.num_programs(2) - 1)
    def _():
        # Deferred normalization: one reciprocal on (tq, 1).  EUP-approx when
        # the output is sub-32-bit, exact for f32 outputs.
        approx = jnp.dtype(o_ref.dtype).itemsize < 4
        inv_l = pl.reciprocal(l_sc[...], approx=approx)
        o_ref[...] = (acc_sc[...] * inv_l).astype(o_ref.dtype)


def _flash_kernel_masked(q_ref, k_ref, v_ref, mask_ref, o_ref,
                         m_sc, l_sc, acc_sc):
    # q is already pre-scaled by 1/sqrt(d_k) in the wrapper (hoisted).
    s = lax.dot_general(q_ref[...], k_ref[...], (((1,), (1,)), ((), ())),
                        preferred_element_type=jnp.float32)
    s = jnp.where(mask_ref[...] != 0, s, _NEG_SENTINEL)
    _attn_tile_update(s, v_ref[...], o_ref, m_sc, l_sc, acc_sc)


def _flash_kernel_nomask(q_ref, k_ref, v_ref, o_ref,
                         m_sc, l_sc, acc_sc, *, kv_len, tk):
    s = lax.dot_general(q_ref[...], k_ref[...], (((1,), (1,)), ((), ())),
                        preferred_element_type=jnp.float32)
    if kv_len is not None:  # static: only emitted when keys were padded
        col = pl.program_id(2) * tk + lax.broadcasted_iota(jnp.int32, s.shape, 1)
        s = jnp.where(col < kv_len, s, _NEG_SENTINEL)
    _attn_tile_update(s, v_ref[...], o_ref, m_sc, l_sc, acc_sc)


@functools.partial(jax.jit, static_argnames=("tq", "tk"))
def scaled_dot_attention(q, k, v, mask=None, *, tq=256, tk=256):
    """ScaledDotAttention forward.

    q: (Sq, Dk) or (B, Sq, Dk); k: (..., Sk, Dk); v: (..., Sk, Dv);
    mask: (..., Sq, Sk) bool/int (nonzero = keep) or None.
    """
    q, k, v = jnp.asarray(q), jnp.asarray(k), jnp.asarray(v)
    assert q.ndim in (2, 3), "expected 2-D (Sq, Dk) or 3-D (B, Sq, Dk) inputs"
    squeeze_batch = q.ndim == 2
    if squeeze_batch:
        q, k, v = q[None], k[None], v[None]
        if mask is not None:
            mask = jnp.asarray(mask)[None]

    B, Sq, Dk = q.shape
    _, Sk, Dv = v.shape
    assert k.shape == (B, Sk, Dk), (k.shape, (B, Sk, Dk))

    out_dtype = q.dtype
    out_bytes = jnp.dtype(out_dtype).itemsize
    compute_dtype = jnp.bfloat16          # native MXU rate, half the K/V HBM bytes
    scale = 1.0 / (Dk ** 0.5)
    has_mask = mask is not None

    # Tile sizes: tq multiple of 32 (int8 mask sublane packing), tk multiple of
    # 128 (lane axis of the score / mask tile).
    tq = _round_up(max(1, min(tq, Sq)), 32)
    tk = _round_up(max(1, min(tk, Sk)), 128)
    Sq_p = _round_up(Sq, tq)

    # Expose >= 2 parallel blocks so both TensorCores of a v7x chip get work.
    if B * (Sq_p // tq) < 2 and Sq_p > 32:
        tq = _round_up(-(-Sq_p // 2), 32)
        Sq_p = _round_up(Sq, tq)

    # Dv padded to 128 keeps output stores lane-dense; Dk is NOT padded
    # (BlockSpec last dim == full array dim is legal) to avoid wasted DMA/MXU.
    Dv_p = _round_up(Dv, 128)

    # Cap tiles so the per-step working set fits v7x's smaller VMEM.
    while tk > 128 and _tile_vmem_bytes(tq, tk, Dk, Dv_p, out_bytes, has_mask) > _VMEM_TILE_BUDGET:
        tk -= 128
    while tq > 32 and _tile_vmem_bytes(tq, tk, Dk, Dv_p, out_bytes, has_mask) > _VMEM_TILE_BUDGET:
        tq -= 32
    Sq_p = _round_up(Sq, tq)
    Sk_p = _round_up(Sk, tk)

    # Fold 1/sqrt(d_k) + bf16 cast into the pad copies (single fused XLA copy).
    qp = jnp.pad((q.astype(jnp.float32) * scale).astype(compute_dtype),
                 ((0, 0), (0, Sq_p - Sq), (0, 0)))
    kp = jnp.pad(k.astype(compute_dtype), ((0, 0), (0, Sk_p - Sk), (0, 0)))
    vp = jnp.pad(v.astype(compute_dtype),
                 ((0, 0), (0, Sk_p - Sk), (0, Dv_p - Dv)))

    grid = (B, Sq_p // tq, Sk_p // tk)

    q_spec = pl.BlockSpec((None, tq, Dk), lambda b, i, j: (b, i, 0))
    k_spec = pl.BlockSpec((None, tk, Dk), lambda b, i, j: (b, j, 0))
    v_spec = pl.BlockSpec((None, tk, Dv_p), lambda b, i, j: (b, j, 0))
    o_spec = pl.BlockSpec((None, tq, Dv_p), lambda b, i, j: (b, i, 0))

    scratch = [pltpu.VMEM((tq, 1), jnp.float32),     # running max m
               pltpu.VMEM((tq, 1), jnp.float32),     # running denominator l
               pltpu.VMEM((tq, Dv_p), jnp.float32)]  # unnormalized output acc

    cparams = pltpu.CompilerParams(
        dimension_semantics=("parallel", "parallel", "arbitrary"),
        vmem_limit_bytes=_VMEM_LIMIT_BYTES)
    out_shape = jax.ShapeDtypeStruct((B, Sq_p, Dv_p), out_dtype)

    if has_mask:
        # int8 mask: 4x less HBM traffic than int32; padded rows/keys land as 0.
        mask_p = jnp.pad(jnp.asarray(mask).astype(jnp.int8),
                         ((0, 0), (0, Sq_p - Sq), (0, Sk_p - Sk)))
        m_spec = pl.BlockSpec((None, tq, tk), lambda b, i, j: (b, i, j))
        out = pl.pallas_call(
            _flash_kernel_masked,
            out_shape=out_shape,
            grid_spec=pltpu.PrefetchScalarGridSpec(
                num_scalar_prefetch=0, grid=grid,
                in_specs=[q_spec, k_spec, v_spec, m_spec],
                out_specs=o_spec, scratch_shapes=scratch),
            compiler_params=cparams,
        )(qp, kp, vp, mask_p)
    else:
        out = pl.pallas_call(
            functools.partial(_flash_kernel_nomask,
                              kv_len=(Sk if Sk_p != Sk else None), tk=tk),
            out_shape=out_shape,
            grid_spec=pltpu.PrefetchScalarGridSpec(
                num_scalar_prefetch=0, grid=grid,
                in_specs=[q_spec, k_spec, v_spec],
                out_specs=o_spec, scratch_shapes=scratch),
            compiler_params=cparams,
        )(qp, kp, vp)

    out = out[:, :Sq, :Dv]
    if squeeze_batch:
        out = out[0]
    return out


def _reference(q, k, v, mask=None):
    d_k = q.shape[-1]
    qf, kf, vf = (x.astype(jnp.float32) for x in (q, k, v))
    scores = jnp.matmul(qf, jnp.swapaxes(kf, -1, -2),
                        precision=lax.Precision.HIGHEST) / (d_k ** 0.5)
    if mask is not None:
        scores = jnp.where(mask, scores, -jnp.inf)
    p = jax.nn.softmax(scores, axis=-1)
    return jnp.matmul(p, vf, precision=lax.Precision.HIGHEST)


if __name__ == "__main__":
    key = jax.random.PRNGKey(0)
    k1, k2, k3, k4, k5, k6, k7 = jax.random.split(key, 7)

    # Tolerance allows bf16 MXU operands with f32 accumulation.
    ATOL = RTOL = 2e-2

    # --- case 1: 2-D, no mask, multiple kv tiles, Dk < 128 (no head padding) ---
    Sq, Sk, Dk, Dv = 128, 256, 64, 64
    q = jax.random.normal(k1, (Sq, Dk), dtype=jnp.float32)
    k = jax.random.normal(k2, (Sk, Dk), dtype=jnp.float32)
    v = jax.random.normal(k3, (Sk, Dv), dtype=jnp.float32)
    out = scaled_dot_attention(q, k, v, tq=256, tk=128)
    jax.block_until_ready(out)
    ref = _reference(q, k, v)
    assert out.shape == ref.shape
    assert jnp.allclose(out, ref, atol=ATOL, rtol=RTOL), (
        "unmasked mismatch, max abs diff %e" % float(jnp.max(jnp.abs(out - ref))))

    # --- case 2: batched (B*H), boolean mask, ragged lengths exercising padding ---
    B, Sq, Sk, Dk, Dv = 2, 96, 160, 16, 48
    q = jax.random.normal(k4, (B, Sq, Dk), dtype=jnp.float32)
    k = jax.random.normal(k5, (B, Sk, Dk), dtype=jnp.float32)
    v = jax.random.normal(k6, (B, Sk, Dv), dtype=jnp.float32)
    mask = jax.random.bernoulli(k7, p=0.7, shape=(B, Sq, Sk))
    mask = mask.at[..., 0].set(True)  # keep at least one key per query
    out_m = scaled_dot_attention(q, k, v, mask=mask)
    jax.block_until_ready(out_m)
    ref_m = _reference(q, k, v, mask=mask)
    assert out_m.shape == ref_m.shape
    assert jnp.allclose(out_m, ref_m, atol=ATOL, rtol=RTOL), (
        "masked mismatch, max abs diff %e" % float(jnp.max(jnp.abs(out_m - ref_m))))

    # sanity: no NaN/inf anywhere
    assert bool(jnp.all(jnp.isfinite(out))) and bool(jnp.all(jnp.isfinite(out_m)))

    print("KERNEL_OK")
</pallas_src>

<mosaic_0001>
module attributes {stable_mosaic.version = 11 : i64} {
  func.func @_flash_kernel_nomask(%arg0: i32, %arg1: i32, %arg2: i32, %arg3: memref<1x64x64xbf16, #tpu.memory_space<vmem>>, %arg4: memref<1x128x64xbf16, #tpu.memory_space<vmem>>, %arg5: memref<1x128x128xbf16, #tpu.memory_space<vmem>>, %arg6: memref<1x64x128xf32, #tpu.memory_space<vmem>>, %arg7: memref<64x1xf32, #tpu.memory_space<vmem>>, %arg8: memref<64x1xf32, #tpu.memory_space<vmem>>, %arg9: memref<64x128xf32, #tpu.memory_space<vmem>>) attributes {dimension_semantics = [#tpu.dimension_semantics<parallel>, #tpu.dimension_semantics<parallel>, #tpu.dimension_semantics<arbitrary>], iteration_bounds = array<i64: 1, 2, 2>, scalar_prefetch = 0 : i64, scratch_operands = 3 : i64, tpu.core_type = #tpu.core_type<tc>, window_params = [{transform_indices = @transform_0, window_bounds = array<i64: 1, 64, 64>}, {transform_indices = @transform_1, window_bounds = array<i64: 1, 128, 64>}, {transform_indices = @transform_2, window_bounds = array<i64: 1, 128, 128>}, {transform_indices = @transform_3, window_bounds = array<i64: 1, 64, 128>}]} {
    %c0 = arith.constant 0 : index
    %c0_0 = arith.constant 0 : index
    %c0_1 = arith.constant 0 : index
    %0 = vector.load %arg3[%c0, %c0_0, %c0_1] : memref<1x64x64xbf16, #tpu.memory_space<vmem>>, vector<1x64x64xbf16>
    %1 = vector.shape_cast %0 : vector<1x64x64xbf16> to vector<64x64xbf16>
    %c0_2 = arith.constant 0 : index
    %c0_3 = arith.constant 0 : index
    %c0_4 = arith.constant 0 : index
    %2 = vector.load %arg4[%c0_2, %c0_3, %c0_4] : memref<1x128x64xbf16, #tpu.memory_space<vmem>>, vector<1x128x64xbf16>
    %3 = vector.shape_cast %2 : vector<1x128x64xbf16> to vector<128x64xbf16>
    %cst = arith.constant dense<0.000000e+00> : vector<64x128xf32>
    %4 = tpu.matmul %1, %3, %cst {dimension_numbers = #tpu.dot_dimension_numbers<[1], [1], [0], [0], [0, 0, 1, 0], [], []>} : vector<64x64xbf16>, vector<128x64xbf16>, vector<64x128xf32> -> vector<64x128xf32>
    %c0_5 = arith.constant 0 : index
    %c0_6 = arith.constant 0 : index
    %c0_7 = arith.constant 0 : index
    %5 = vector.load %arg5[%c0_5, %c0_6, %c0_7] : memref<1x128x128xbf16, #tpu.memory_space<vmem>>, vector<1x128x128xbf16>
    %6 = vector.shape_cast %5 : vector<1x128x128xbf16> to vector<128x128xbf16>
    %c0_i32 = arith.constant 0 : i32
    %7 = arith.cmpi eq, %arg2, %c0_i32 : i32
    %8 = arith.extui %7 : i1 to i32
    %c0_i32_8 = arith.constant 0 : i32
    %9 = arith.cmpi ne, %8, %c0_i32_8 : i32
    scf.if %9 {
      %cst_25 = arith.constant 0xFF800000 : f32
      %36 = vector.broadcast %cst_25 : f32 to vector<64x1xf32>
      %c0_26 = arith.constant 0 : index
      %c0_27 = arith.constant 0 : index
      %37 = vector.load %arg7[%c0_26, %c0_27] : memref<64x1xf32, #tpu.memory_space<vmem>>, vector<64x1xf32>
      tpu.vector_store %arg7[%c0_26, %c0_27], %36 {strides = array<i32>} : memref<64x1xf32, #tpu.memory_space<vmem>>, vector<64x1xf32>,
      %cst_28 = arith.constant 0.000000e+00 : f32
      %38 = vector.broadcast %cst_28 : f32 to vector<64x1xf32>
      %c0_29 = arith.constant 0 : index
      %c0_30 = arith.constant 0 : index
      %39 = vector.load %arg8[%c0_29, %c0_30] : memref<64x1xf32, #tpu.memory_space<vmem>>, vector<64x1xf32>
      tpu.vector_store %arg8[%c0_29, %c0_30], %38 {strides = array<i32>} : memref<64x1xf32, #tpu.memory_space<vmem>>, vector<64x1xf32>,
      %cst_31 = arith.constant 0.000000e+00 : f32
      %40 = vector.broadcast %cst_31 : f32 to vector<64x128xf32>
      %c0_32 = arith.constant 0 : index
      %c0_33 = arith.constant 0 : index
      %41 = vector.load %arg9[%c0_32, %c0_33] : memref<64x128xf32, #tpu.memory_space<vmem>>, vector<64x128xf32>
      tpu.vector_store %arg9[%c0_32, %c0_33], %40 {strides = array<i32>} : memref<64x128xf32, #tpu.memory_space<vmem>>, vector<64x128xf32>,
    } else {
    }
    %c0_9 = arith.constant 0 : index
    %c0_10 = arith.constant 0 : index
    %10 = vector.load %arg7[%c0_9, %c0_10] : memref<64x1xf32, #tpu.memory_space<vmem>>, vector<64x1xf32>
    %cst_11 = arith.constant dense<0xFF800000> : vector<64xf32>
    %11 = vector.multi_reduction <maximumf>, %4, %cst_11 [1] : vector<64x128xf32> to vector<64xf32>
    %12 = vector.shape_cast %11 : vector<64xf32> to vector<64x1xf32>
    %13 = arith.maximumf %10, %12 : vector<64x1xf32>
    %14 = arith.subf %10, %13 : vector<64x1xf32>
    %15 = math.exp %14 : vector<64x1xf32>
    %16 = vector.broadcast %13 : vector<64x1xf32> to vector<64x128xf32>
    %17 = arith.subf %4, %16 : vector<64x128xf32>
    %18 = math.exp %17 : vector<64x128xf32>
    %c0_12 = arith.constant 0 : index
    %c0_13 = arith.constant 0 : index
    %19 = vector.load %arg8[%c0_12, %c0_13] : memref<64x1xf32, #tpu.memory_space<vmem>>, vector<64x1xf32>
    %20 = arith.mulf %15, %19 : vector<64x1xf32>
    %cst_14 = arith.constant dense<0.000000e+00> : vector<64xf32>
    %21 = vector.multi_reduction <add>, %18, %cst_14 [1] : vector<64x128xf32> to vector<64xf32>
    %22 = vector.shape_cast %21 : vector<64xf32> to vector<64x1xf32>
    %23 = arith.addf %20, %22 : vector<64x1xf32>
    %c0_15 = arith.constant 0 : index
    %c0_16 = arith.constant 0 : index
    %24 = vector.load %arg8[%c0_15, %c0_16] : memref<64x1xf32, #tpu.memory_space<vmem>>, vector<64x1xf32>
    tpu.vector_store %arg8[%c0_15, %c0_16], %23 {strides = array<i32>} : memref<64x1xf32, #tpu.memory_space<vmem>>, vector<64x1xf32>,
    %c0_17 = arith.constant 0 : index
    %c0_18 = arith.constant 0 : index
    %25 = vector.load %arg9[%c0_17, %c0_18] : memref<64x128xf32, #tpu.memory_space<vmem>>, vector<64x128xf32>
    %26 = vector.broadcast %15 : vector<64x1xf32> to vector<64x128xf32>
    %27 = arith.mulf %26, %25 : vector<64x128xf32>
    %28 = arith.truncf %18 : vector<64x128xf32> to vector<64x128xbf16>
    %cst_19 = arith.constant dense<0.000000e+00> : vector<64x128xf32>
    %29 = tpu.matmul %28, %6, %cst_19 {dimension_numbers = #tpu.dot_dimension_numbers<[1], [0], [0], [1], [0, 0, 1, 1], [], []>} : vector<64x128xbf16>, vector<128x128xbf16>, vector<64x128xf32> -> vector<64x128xf32>
    %30 = arith.addf %27, %29 : vector<64x128xf32>
    %c0_20 = arith.constant 0 : index
    %c0_21 = arith.constant 0 : index
    %31 = vector.load %arg9[%c0_20, %c0_21] : memref<64x128xf32, #tpu.memory_space<vmem>>, vector<64x128xf32>
    tpu.vector_store %arg9[%c0_20, %c0_21], %30 {strides = array<i32>} : memref<64x128xf32, #tpu.memory_space<vmem>>, vector<64x128xf32>,
    %c0_22 = arith.constant 0 : index
    %c0_23 = arith.constant 0 : index
    %32 = vector.load %arg7[%c0_22, %c0_23] : memref<64x1xf32, #tpu.memory_space<vmem>>, vector<64x1xf32>
    tpu.vector_store %arg7[%c0_22, %c0_23], %13 {strides = array<i32>} : memref<64x1xf32, #tpu.memory_space<vmem>>, vector<64x1xf32>,
    %c1_i32 = arith.constant 1 : i32
    %33 = arith.cmpi eq, %arg2, %c1_i32 : i32
    %34 = arith.extui %33 : i1 to i32
    %c0_i32_24 = arith.constant 0 : i32
    %35 = arith.cmpi ne, %34, %c0_i32_24 : i32
    scf.if %35 {
      %c0_25 = arith.constant 0 : index
      %c0_26 = arith.constant 0 : index
      %36 = vector.load %arg8[%c0_25, %c0_26] : memref<64x1xf32, #tpu.memory_space<vmem>>, vector<64x1xf32>
      %37 = tpu.reciprocal %36 : vector<64x1xf32> -> vector<64x1xf32>
      %c0_27 = arith.constant 0 : index
      %c0_28 = arith.constant 0 : index
      %38 = vector.load %arg9[%c0_27, %c0_28] : memref<64x128xf32, #tpu.memory_space<vmem>>, vector<64x128xf32>
      %39 = vector.broadcast %37 : vector<64x1xf32> to vector<64x128xf32>
      %40 = arith.mulf %38, %39 : vector<64x128xf32>
      %c0_29 = arith.constant 0 : index
      %c0_30 = arith.constant 0 : index
      %c0_31 = arith.constant 0 : index
      %41 = vector.load %arg6[%c0_29, %c0_30, %c0_31] : memref<1x64x128xf32, #tpu.memory_space<vmem>>, vector<1x64x128xf32>
      %42 = vector.shape_cast %41 : vector<1x64x128xf32> to vector<64x128xf32>
      %43 = vector.shape_cast %40 : vector<64x128xf32> to vector<1x64x128xf32>
      tpu.vector_store %arg6[%c0_29, %c0_30, %c0_31], %43 {strides = array<i32>} : memref<1x64x128xf32, #tpu.memory_space<vmem>>, vector<1x64x128xf32>,
    } else {
    }
    return
  }
  func.func @transform_0(%arg0: i32, %arg1: i32, %arg2: i32) -> (i32, i32, i32) {
    %c0_i32 = arith.constant 0 : i32
    %c0_i32_0 = arith.constant 0 : i32
    return %arg0, %arg1, %c0_i32 : i32, i32, i32
  }
  func.func @transform_1(%arg0: i32, %arg1: i32, %arg2: i32) -> (i32, i32, i32) {
    %c0_i32 = arith.constant 0 : i32
    %c0_i32_0 = arith.constant 0 : i32
    return %arg0, %arg2, %c0_i32 : i32, i32, i32
  }
  func.func @transform_2(%arg0: i32, %arg1: i32, %arg2: i32) -> (i32, i32, i32) {
    %c0_i32 = arith.constant 0 : i32
    %c0_i32_0 = arith.constant 0 : i32
    return %arg0, %arg2, %c0_i32 : i32, i32, i32
  }
  func.func @transform_3(%arg0: i32, %arg1: i32, %arg2: i32) -> (i32, i32, i32) {
    %c0_i32 = arith.constant 0 : i32
    %c0_i32_0 = arith.constant 0 : i32
    return %arg0, %arg1, %c0_i32 : i32, i32, i32
  }
}

</mosaic_0001>

<llo_original>
// kernel: scaled_dot_attention.1
$region0: #{scaled_dot_attention.1}
  #allocation0 [shape = 'u32[]', space=smem, size = 0x4, offset = 0x4, fixed_abs, tag = 'smem constant byte address 0x4 - core index']
  #allocation1 [shape = 'u32[144,128]{1,0:T(1,128)}', space=vmem, size = 0x12000, scoped, tag = 'internal scratch']
  #allocation2 [shape = 'f32[64,1]{1,0:T(8,128)}', space=vmem, size = 0x8000, scoped, tag = 'scratch operand']
  #allocation3 [shape = 'f32[64,1]{1,0:T(8,128)}', space=vmem, size = 0x8000, scoped, tag = 'scratch operand']
  #allocation4 [shape = 'f32[64,128]{1,0:T(8,128)}', space=vmem, size = 0x8000, scoped, tag = 'scratch operand']
  %s0 = inlined_call_operand.vmem [shape: bf16[1,128,64], index: 0, kind: input, shape index: {}]
  %s1 = inlined_call_operand.vmem [shape: bf16[1,256,64], index: 1, kind: input, shape index: {}]
  %s2 = inlined_call_operand.vmem [shape: bf16[1,256,128], index: 2, kind: input, shape index: {}]
  %s3 = inlined_call_operand.vmem [shape: f32[1,128,128], index: 3, kind: output, shape index: {}]
  %s4 = sld [smem:[#allocation0]]
  $region53: #{scaled_dot_attention.1} parent=0
    _
  %s6 = ssub.s32 1, %s4
  %s7 = scalar_select 0, %s6, %s4
  loop: start=0, step=1, limit=6
  $region2: #{scaled_dot_attention.1} parent=0 // loop_pre_header
    _
  $region3: #{scaled_dot_attention.1} parent=0 // loop_header
    %s9 = sphi 0, %s13
    %p10 = scmp.ge.s32.totalorder %s9, 6
    %s16 = sphi 0, %s35
    %s17 = sphi 0, %s31
    %s18 = sphi 0, %s27
    %s19 = sphi 0, %s16
    %s20 = sphi 0, %s17
    %s21 = sphi 0, %s18
    %s22 = sphi 0, %s19
    %s23 = sphi 0, %s20
    %s24 = sphi 0, %s21
    %s40 = sphi 0, %s42
    %s43 = sphi 0, %s40
    %s44 = sphi 0, %s43
    %s60 = sphi 0, %s44
    %s68 = sphi 0, %s70
    %s71 = sphi 0, %s68
    %s72 = sphi 0, %s71
    %s88 = sphi 0, %s72
    %s96 = sphi 0, %s98
    %s99 = sphi 0, %s96
    %s100 = sphi 0, %s99
    %s116 = sphi 0, %s100
    %s124 = sphi 0, %s126
    %s127 = sphi 0, %s124
    %s128 = sphi 0, %s127
    %s144 = sphi 0, %s128
  $region4: #{scaled_dot_attention.1} parent=0 // loop_header_branch
    %12 = sbr.rel (%p10) target = $region8
  $region5: #{scaled_dot_attention.1} parent=0 // loop_body
    %s14 = ssub.s32 %s9, 1
    %s15 = ssub.s32 %s9, 2
    %s25 = sadd.s32 1, %s18
    %p26 = scmp.ge.s32.totalorder %s25, 2
    %s27 = scalar_select %p26, 0, %s25
    %s28 = sadd.s32 1, %s17
    %s29 = scalar_select %p26, %s28, %s17
    %p30 = scmp.ge.s32.totalorder %s29, 2
    %s31 = scalar_select %p30, 0, %s29
    %s32 = sadd.s32 1, %s16
    %s33 = scalar_select %p30, %s32, %s16
    %p34 = scmp.ge.s32.totalorder %s33, 1
    %s35 = scalar_select %p34, 0, %s33
    %s36 = ssub.s32 %s16, %s35
    %s37 = ssub.s32 %s17, %s31
    %s38 = sor.u32 %s36, %s37
    %p39 = scmp.eq.s32.totalorder %s38, 0
    %s41 = sadd.s32 %s40, 1
    %s42 = scalar_select %p39, %s40, %s41
    %p45 = pneg %p39
    %p46 = scmp.eq.s32.totalorder %s9, 3
    %p47 = por %p45, %p46
    %p48 = scmp.ne.s32.totalorder %s40, %s43
    %p49 = scmp.eq.s32.totalorder %s9, 0
    %p50 = por %p48, %p49
    %p51 = scmp.ne.s32.totalorder %s40, %s43
    %p52 = scmp.eq.s32.totalorder %s14, 3
    %p53 = por %p51, %p52
    %p54 = scmp.ne.s32.totalorder %s43, %s44
    %p55 = scmp.eq.s32.totalorder %s14, 0
    %p56 = por %p54, %p55
    %p57 = scmp.ne.s32.totalorder %s43, %s44
    %p58 = scmp.eq.s32.totalorder %s15, 3
    %p59 = por %p57, %p58
    %p61 = scmp.ne.s32.totalorder %s44, %s60
    %p62 = scmp.eq.s32.totalorder %s15, 0
    %p63 = por %p61, %p62
    %s64 = ssub.s32 %s16, %s35
    %s65 = ssub.s32 %s18, %s27
    %s66 = sor.u32 %s64, %s65
    %p67 = scmp.eq.s32.totalorder %s66, 0
    %s69 = sadd.s32 %s68, 1
    %s70 = scalar_select %p67, %s68, %s69
    %p73 = pneg %p67
    %p74 = scmp.eq.s32.totalorder %s9, 3
    %p75 = por %p73, %p74
    %p76 = scmp.ne.s32.totalorder %s68, %s71
    %p77 = scmp.eq.s32.totalorder %s9, 0
    %p78 = por %p76, %p77
    %p79 = scmp.ne.s32.totalorder %s68, %s71
    %p80 = scmp.eq.s32.totalorder %s14, 3
    %p81 = por %p79, %p80
    %p82 = scmp.ne.s32.totalorder %s71, %s72
    %p83 = scmp.eq.s32.totalorder %s14, 0
    %p84 = por %p82, %p83
    %p85 = scmp.ne.s32.totalorder %s71, %s72
    %p86 = scmp.eq.s32.totalorder %s15, 3
    %p87 = por %p85, %p86
    %p89 = scmp.ne.s32.totalorder %s72, %s88
    %p90 = scmp.eq.s32.totalorder %s15, 0
    %p91 = por %p89, %p90
    %s92 = ssub.s32 %s16, %s35
    %s93 = ssub.s32 %s18, %s27
    %s94 = sor.u32 %s92, %s93
    %p95 = scmp.eq.s32.totalorder %s94, 0
    %s97 = sadd.s32 %s96, 1
    %s98 = scalar_select %p95, %s96, %s97
    %p101 = pneg %p95
    %p102 = scmp.eq.s32.totalorder %s9, 3
    %p103 = por %p101, %p102
    %p104 = scmp.ne.s32.totalorder %s96, %s99
    %p105 = scmp.eq.s32.totalorder %s9, 0
    %p106 = por %p104, %p105
    %p107 = scmp.ne.s32.totalorder %s96, %s99
    %p108 = scmp.eq.s32.totalorder %s14, 3
    %p109 = por %p107, %p108
    %p110 = scmp.ne.s32.totalorder %s99, %s100
    %p111 = scmp.eq.s32.totalorder %s14, 0
    %p112 = por %p110, %p111
    %p113 = scmp.ne.s32.totalorder %s99, %s100
    %p114 = scmp.eq.s32.totalorder %s15, 3
    %p115 = por %p113, %p114
    %p117 = scmp.ne.s32.totalorder %s100, %s116
    %p118 = scmp.eq.s32.totalorder %s15, 0
    %p119 = por %p117, %p118
    %s120 = ssub.s32 %s16, %s35
    %s121 = ssub.s32 %s17, %s31
    %s122 = sor.u32 %s120, %s121
    %p123 = scmp.eq.s32.totalorder %s122, 0
    %s125 = sadd.s32 %s124, 1
    %s126 = scalar_select %p123, %s124, %s125
    %p129 = pneg %p123
    %p130 = scmp.eq.s32.totalorder %s9, 3
    %p131 = por %p129, %p130
    %p132 = scmp.ne.s32.totalorder %s124, %s127
    %p133 = scmp.eq.s32.totalorder %s9, 0
    %p134 = por %p132, %p133
    %p135 = scmp.ne.s32.totalorder %s124, %s127
    %p136 = scmp.eq.s32.totalorder %s14, 3
    %p137 = por %p135, %p136
    %p138 = scmp.ne.s32.totalorder %s127, %s128
    %p139 = scmp.eq.s32.totalorder %s14, 0
    %p140 = por %p138, %p139
    %p141 = scmp.ne.s32.totalorder %s127, %s128
    %p142 = scmp.eq.s32.totalorder %s15, 3
    %p143 = por %p141, %p142
    %p145 = scmp.ne.s32.totalorder %s128, %s144
    %p146 = scmp.eq.s32.totalorder %s15, 0
    %p147 = por %p145, %p146
    %p148 = scmp.le.s32.totalorder 1, %s9
    %p149 = scmp.lt.s32.totalorder %s9, 5
    %p150 = pnand %p148, %p149
    %p151 = pneg %p150
    // Predicated region
    $region9: #{scaled_dot_attention.1} parent=5 // pred_check
      _
    $region10: #{scaled_dot_attention.1} parent=5 // pred_check_branch
      %153 = sbr.rel (%p150) target = $region12
    $region11: #{scaled_dot_attention.1} parent=5 // pred_region
      %s154 = ssub.s32 %s9, 1
    $region12: #{scaled_dot_attention.1} parent=5 // pred_fallthru
      _
    %p155 = scmp.lt.s32.totalorder %s9, 4
    // Predicated region
    $region13: #{scaled_dot_attention.1} parent=5 // pred_check
      %p156 = pneg %p155
    $region14: #{scaled_dot_attention.1} parent=5 // pred_check_branch
      %158 = sbr.rel (%p156) target = $region16
    $region15: #{scaled_dot_attention.1} parent=5 // pred_region
      // Predicated region
      $region17: #{scaled_dot_attention.1} parent=15 // pred_check
        %p159 = pneg %p50
      $region18: #{scaled_dot_attention.1} parent=15 // pred_check_branch
        %161 = sbr.rel (%p159) target = $region20
      $region19: #{scaled_dot_attention.1} parent=15 // pred_region
        %s162 = smul.u32 8, %s17
        %p163 = scmp.lt.s32.totalorder %s16, 0
        %s164 = scalar_select %p163, %s16, 0
        %p165 = scmp.lt.s32.totalorder %s162, 15
        %s166 = scalar_select %p165, %s162, 15
        %s167 = smul.addr %s164, 16
        %s168 = sadd.s32 %s166, %s167
        %s169 = smul.addr %s168, 4
        %s170 = scalar_lea.vmem %s0, %s169
        %s171 = smul.u32 8, %s17
      $region20: #{scaled_dot_attention.1} parent=15 // pred_fallthru
        _
      // Predicated region
      $region21: #{scaled_dot_attention.1} parent=15 // pred_check
        %p172 = pneg %p78
      $region22: #{scaled_dot_attention.1} parent=15 // pred_check_branch
        %174 = sbr.rel (%p172) target = $region24
      $region23: #{scaled_dot_attention.1} parent=15 // pred_region
        %s175 = smul.u32 16, %s18
        %p176 = scmp.lt.s32.totalorder %s16, 0
        %s177 = scalar_select %p176, %s16, 0
        %p178 = scmp.lt.s32.totalorder %s175, 31
        %s179 = scalar_select %p178, %s175, 31
        %s180 = smul.addr %s177, 32
        %s181 = sadd.s32 %s179, %s180
        %s182 = smul.addr %s181, 4
        %s183 = scalar_lea.vmem %s1, %s182
        %s184 = smul.u32 16, %s18
      $region24: #{scaled_dot_attention.1} parent=15 // pred_fallthru
        _
      // Predicated region
      $region25: #{scaled_dot_attention.1} parent=15 // pred_check
        %p185 = pneg %p106
      $region26: #{scaled_dot_attention.1} parent=15 // pred_check_branch
        %187 = sbr.rel (%p185) target = $region28
      $region27: #{scaled_dot_attention.1} parent=15 // pred_region
        %s188 = smul.u32 16, %s18
        %p189 = scmp.lt.s32.totalorder %s16, 0
        %s190 = scalar_select %p189, %s16, 0
        %p191 = scmp.lt.s32.totalorder %s188, 31
        %s192 = scalar_select %p191, %s188, 31
        %s193 = smul.addr %s190, 32
        %s194 = sadd.s32 %s192, %s193
        %s195 = smul.addr %s194, 4
        %s196 = scalar_lea.vmem %s2, %s195
        %s197 = smul.u32 16, %s18
      $region28: #{scaled_dot_attention.1} parent=15 // pred_fallthru
        _
    $region16: #{scaled_dot_attention.1} parent=5 // pred_fallthru
      _
    %p198 = scmp.le.s32.totalorder 1, %s9
    %p199 = scmp.lt.s32.totalorder %s9, 5
    %p200 = pnand %p198, %p199
    %p201 = pneg %p200
    // Predicated region
    $region29: #{scaled_dot_attention.1} parent=5 // pred_check
      _
    $region30: #{scaled_dot_attention.1} parent=5 // pred_check_branch
      %203 = sbr.rel (%p200) target = $region32
    $region31: #{scaled_dot_attention.1} parent=5 // pred_region
      %s204 = ssub.s32 %s9, 1
      %s205 = smul.u32 8, %s20
      %p206 = scmp.lt.s32.totalorder %s19, 0
      %s207 = scalar_select %p206, %s19, 0
      %p208 = scmp.lt.s32.totalorder %s205, 15
      %s209 = scalar_select %p208, %s205, 15
      %s210 = smul.addr %s207, 16
      %s211 = sadd.s32 %s209, %s210
      %s212 = smul.addr %s211, 4
      %s213 = scalar_lea.vmem %s0, %s212
      %p214 = pneg %p56
      %p215 = pneg %p53
      %s216 = smul.u32 16, %s21
      %p217 = scmp.lt.s32.totalorder %s19, 0
      %s218 = scalar_select %p217, %s19, 0
      %p219 = scmp.lt.s32.totalorder %s216, 31
      %s220 = scalar_select %p219, %s216, 31
      %s221 = smul.addr %s218, 32
      %s222 = sadd.s32 %s220, %s221
      %s223 = smul.addr %s222, 4
      %s224 = scalar_lea.vmem %s1, %s223
      %p225 = pneg %p84
      %p226 = pneg %p81
      %s227 = smul.u32 16, %s21
      %p228 = scmp.lt.s32.totalorder %s19, 0
      %s229 = scalar_select %p228, %s19, 0
      %p230 = scmp.lt.s32.totalorder %s227, 31
      %s231 = scalar_select %p230, %s227, 31
      %s232 = smul.addr %s229, 32
      %s233 = sadd.s32 %s231, %s232
      %s234 = smul.addr %s233, 4
      %s235 = scalar_lea.vmem %s2, %s234
      %p236 = pneg %p112
      %p237 = pneg %p109
      %p238 = pneg %p140
      %p239 = pneg %p137
      %s240 = smul.u32 8, %s20
      %p241 = scmp.lt.s32.totalorder %s19, 0
      %s242 = scalar_select %p241, %s19, 0
      %p243 = scmp.lt.s32.totalorder %s240, 15
      %s244 = scalar_select %p243, %s240, 15
      %s245 = smul.addr %s242, 16
      %s246 = sadd.s32 %s244, %s245
      %s247 = smul.addr %s246, 8
      %s248 = scalar_lea.vmem %s3, %s247
      %s249 = smul.u32 8, %s20
      %p250 = scmp.lt.s32.totalorder %s19, 0
      %s251 = scalar_select %p250, %s19, 0
      %p252 = scmp.lt.s32.totalorder %s249, 15
      %s253 = scalar_select %p252, %s249, 15
      %s254 = smul.addr %s251, 16
      %s255 = sadd.s32 %s253, %s254
      %s256 = smul.addr %s255, 4
      %s257 = scalar_lea.vmem %s0, %s256
      %s258 = smul.u32 8, %s20
      %s259 = smul.u32 16, %s21
      %p260 = scmp.lt.s32.totalorder %s19, 0
      %s261 = scalar_select %p260, %s19, 0
      %p262 = scmp.lt.s32.totalorder %s259, 31
      %s263 = scalar_select %p262, %s259, 31
      %s264 = smul.addr %s261, 32
      %s265 = sadd.s32 %s263, %s264
      %s266 = smul.addr %s265, 4
      %s267 = scalar_lea.vmem %s1, %s266
      %s268 = smul.u32 16, %s21
      %s269 = smul.u32 16, %s21
      %p270 = scmp.lt.s32.totalorder %s19, 0
      %s271 = scalar_select %p270, %s19, 0
      %p272 = scmp.lt.s32.totalorder %s269, 31
      %s273 = scalar_select %p272, %s269, 31
      %s274 = smul.addr %s271, 32
      %s275 = sadd.s32 %s273, %s274
      %s276 = smul.addr %s275, 4
      %s277 = scalar_lea.vmem %s2, %s276
      %s278 = smul.u32 16, %s21
      %s279 = smul.u32 8, %s20
      %p280 = scmp.lt.s32.totalorder %s19, 0
      %s281 = scalar_select %p280, %s19, 0
      %p282 = scmp.lt.s32.totalorder %s279, 15
      %s283 = scalar_select %p282, %s279, 15
      %s284 = smul.addr %s281, 16
      %s285 = sadd.s32 %s283, %s284
      %s286 = smul.addr %s285, 8
      %s287 = scalar_lea.vmem %s3, %s286
      %s288 = smul.u32 8, %s20
      %v290 = vld [vmem:[%s257] sm:$0xf]
      %v291 = vld [vmem:[%s257 + $0x4] sm:$0xf]
      %v292 = vld [vmem:[%s257 + $0x8] sm:$0xf]
      %v293 = vld [vmem:[%s257 + $0xc] sm:$0xf]
      %v294 = vld [vmem:[%s257 + $0x10] sm:$0xf]
      %v295 = vld [vmem:[%s257 + $0x14] sm:$0xf]
      %v296 = vld [vmem:[%s257 + $0x18] sm:$0xf]
      %v297 = vld [vmem:[%s257 + $0x1c] sm:$0xf]
      %v298 = vld [vmem:[%s267] sm:$0xf]
      %v299 = vld [vmem:[%s267 + $0x4] sm:$0xf]
      %v300 = vld [vmem:[%s267 + $0x8] sm:$0xf]
      %v301 = vld [vmem:[%s267 + $0xc] sm:$0xf]
      %v302 = vld [vmem:[%s267 + $0x10] sm:$0xf]
      %v303 = vld [vmem:[%s267 + $0x14] sm:$0xf]
      %v304 = vld [vmem:[%s267 + $0x18] sm:$0xf]
      %v305 = vld [vmem:[%s267 + $0x1c] sm:$0xf]
      %v306 = vld [vmem:[%s267 + $0x20] sm:$0xf]
      %v307 = vld [vmem:[%s267 + $0x24] sm:$0xf]
      %v308 = vld [vmem:[%s267 + $0x28] sm:$0xf]
      %v309 = vld [vmem:[%s267 + $0x2c] sm:$0xf]
      %v310 = vld [vmem:[%s267 + $0x30] sm:$0xf]
      %v311 = vld [vmem:[%s267 + $0x34] sm:$0xf]
      %v312 = vld [vmem:[%s267 + $0x38] sm:$0xf]
      %v313 = vld [vmem:[%s267 + $0x3c] sm:$0xf]
      %v322 = vunpack.c.l.b16 %v290
      %v323 = vunpack.c.l.b16 %v291
      %v324 = vunpack.c.l.b16 %v292
      %v325 = vunpack.c.l.b16 %v293
      %v326 = vunpack.c.l.b16 %v294
      %v327 = vunpack.c.l.b16 %v295
      %v328 = vunpack.c.l.b16 %v296
      %v329 = vunpack.c.l.b16 %v297
      %v330 = vpack.c.b16 %v323, %v322
      %v331 = vpack.c.b16 %v325, %v324
      %v332 = vpack.c.b16 %v327, %v326
      %v333 = vpack.c.b16 %v329, %v328
      %v350 = vunpack.c.l.b16 %v298
      %v351 = vunpack.c.l.b16 %v299
      %v352 = vunpack.c.l.b16 %v300
      %v353 = vunpack.c.l.b16 %v301
      %v354 = vunpack.c.l.b16 %v302
      %v355 = vunpack.c.l.b16 %v303
      %v356 = vunpack.c.l.b16 %v304
      %v357 = vunpack.c.l.b16 %v305
      %v358 = vunpack.c.l.b16 %v306
      %v359 = vunpack.c.l.b16 %v307
      %v360 = vunpack.c.l.b16 %v308
      %v361 = vunpack.c.l.b16 %v309
      %v362 = vunpack.c.l.b16 %v310
      %v363 = vunpack.c.l.b16 %v311
      %v364 = vunpack.c.l.b16 %v312
      %v365 = vunpack.c.l.b16 %v313
      %v366 = vpack.c.b16 %v351, %v350
      %v367 = vpack.c.b16 %v353, %v352
      %v368 = vpack.c.b16 %v355, %v354
      %v369 = vpack.c.b16 %v357, %v356
      %v370 = vpack.c.b16 %v359, %v358
      %v371 = vpack.c.b16 %v361, %v360
      %v372 = vpack.c.b16 %v363, %v362
      %v373 = vpack.c.b16 %v365, %v364
      %vm374 = vcmask 523264
      %v376 = vsel %vm374, %v330, 0
      %v379 = vsel %vm374, %v331, 0
      %v382 = vsel %vm374, %v332, 0
      %v385 = vsel %vm374, %v333, 0
      %v388 = vsel %vm374, %v366, 0
      %v391 = vsel %vm374, %v367, 0
      %v394 = vsel %vm374, %v368, 0
      %v397 = vsel %vm374, %v369, 0
      %v400 = vsel %vm374, %v370, 0
      %v403 = vsel %vm374, %v371, 0
      %v406 = vsel %vm374, %v372, 0
      %v409 = vsel %vm374, %v373, 0
      %411 = vmatprep.subr.bf16.mxu0 0
      %412 = vmatpush1.bf16.xpose.msra.mxu0 %v409
      %413 = vmatprep.subr.bf16.mxu0 0
      %414 = vmatpush1.bf16.xpose.msra.mxu0 %v406
      %415 = vmatprep.subr.bf16.mxu0 0
      %416 = vmatpush1.bf16.xpose.msra.mxu0 %v403
      %417 = vmatprep.subr.bf16.mxu0 0
      %418 = vmatpush1.bf16.xpose.msra.mxu0 %v400
      %419 = vmatprep.subr.bf16.mxu0 0
      %420 = vmatpush1.bf16.xpose.msra.mxu0 %v397
      %421 = vmatprep.subr.bf16.mxu0 0
      %422 = vmatpush1.bf16.xpose.msra.mxu0 %v394
      %423 = vmatprep.subr.bf16.mxu0 0
      %424 = vmatpush1.bf16.xpose.msra.mxu0 %v391
      %425 = vmatprep.subr.bf16.mxu0 0
      %426 = vmatpush1.bf16.xpose.msra.mxu0 %v388
      %427 = vmatprep.subr.bf16.mxu0 0
      %428 = vmatpush2.bf16.xpose.msra.mxu0 0
      %429 = vmatprep.subr.bf16.mxu0 0
      %430 = vmatpush2.bf16.xpose.msra.mxu0 0
      %431 = vmatprep.subr.bf16.mxu0 0
      %432 = vmatpush2.bf16.xpose.msra.mxu0 0
      %433 = vmatprep.subr.bf16.mxu0 0
      %434 = vmatpush2.bf16.xpose.msra.mxu0 0
      %435 = vmatprep.subr.bf16.mxu0 0
      %436 = vmatpush2.bf16.xpose.msra.mxu0 0
      %437 = vmatprep.subr.bf16.mxu0 0
      %438 = vmatpush2.bf16.xpose.msra.mxu0 0
      %439 = vmatprep.subr.bf16.mxu0 0
      %440 = vmatpush2.bf16.xpose.msra.mxu0 0
      %441 = vmatprep.subr.bf16.mxu0 0
      %442 = vmatpush2.bf16.xpose.msra.mxu0 0
      %443 = vmatprep.mubr.bf16.mxu0 0
      %444 = vmatmul.mubr.bf16.gmra.mxu0 %v376
      %v445 = vpop.f32.mrf.mxu0
      %v446 = vadd.f32 0.0, %v445
      %v447 = vpop.f32.mrf.mxu0
      %v448 = vpop.f32.mrf.mxu0
      %v449 = vadd.f32 0.0, %v448
      %v450 = vpop.f32.mrf.mxu0
      %451 = vmatprep.mubr.bf16.mxu0 0
      %452 = vmatmul.mubr.bf16.gmra.mxu0 %v379
      %v453 = vpop.f32.mrf.mxu0
      %v454 = vadd.f32 0.0, %v453
      %v455 = vpop.f32.mrf.mxu0
      %v456 = vpop.f32.mrf.mxu0
      %v457 = vadd.f32 0.0, %v456
      %v458 = vpop.f32.mrf.mxu0
      %459 = vmatprep.mubr.bf16.mxu0 0
      %460 = vmatmul.mubr.bf16.gmra.mxu0 %v382
      %v461 = vpop.f32.mrf.mxu0
      %v462 = vadd.f32 0.0, %v461
      %v463 = vpop.f32.mrf.mxu0
      %v464 = vpop.f32.mrf.mxu0
      %v465 = vadd.f32 0.0, %v464
      %v466 = vpop.f32.mrf.mxu0
      %467 = vmatprep.mubr.bf16.mxu0 0
      %468 = vmatmul.mubr.bf16.gmra.mxu0 %v385
      %v469 = vpop.f32.mrf.mxu0
      %v470 = vadd.f32 0.0, %v469
      %v471 = vpop.f32.mrf.mxu0
      %v472 = vpop.f32.mrf.mxu0
      %v473 = vadd.f32 0.0, %v472
      %v474 = vpop.f32.mrf.mxu0
      %475 = vdwg.mxu0
      %v476 = vld [vmem:[%s277] sm:$0xf]
      %v477 = vld [vmem:[%s277 + $0x4] sm:$0xf]
      %v478 = vld [vmem:[%s277 + $0x8] sm:$0xf]
      %v479 = vld [vmem:[%s277 + $0xc] sm:$0xf]
      %v480 = vld [vmem:[%s277 + $0x10] sm:$0xf]
      %v481 = vld [vmem:[%s277 + $0x14] sm:$0xf]
      %v482 = vld [vmem:[%s277 + $0x18] sm:$0xf]
      %v483 = vld [vmem:[%s277 + $0x1c] sm:$0xf]
      %v484 = vld [vmem:[%s277 + $0x20] sm:$0xf]
      %v485 = vld [vmem:[%s277 + $0x24] sm:$0xf]
      %v486 = vld [vmem:[%s277 + $0x28] sm:$0xf]
      %v487 = vld [vmem:[%s277 + $0x2c] sm:$0xf]
      %v488 = vld [vmem:[%s277 + $0x30] sm:$0xf]
      %v489 = vld [vmem:[%s277 + $0x34] sm:$0xf]
      %v490 = vld [vmem:[%s277 + $0x38] sm:$0xf]
      %v491 = vld [vmem:[%s277 + $0x3c] sm:$0xf]
      %p492 = scmp.eq.s32.totalorder %s21, 0
      // Predicated region
      $region33: #{scaled_dot_attention.1} parent=31 // pred_check
        %p493 = pneg %p492
      $region34: #{scaled_dot_attention.1} parent=31 // pred_check_branch
        %495 = sbr.rel (%p493) target = $region36
      $region35: #{scaled_dot_attention.1} parent=31 // pred_region
        %vm496 = vcmask 7168
        %497 = vst.msk [vmem:[#allocation2] sm:$0xff] %vm496, -inf
        %498 = vst.msk [vmem:[#allocation2 + $0x8] sm:$0xff] %vm496, -inf
        %499 = vst.msk [vmem:[#allocation2 + $0x10] sm:$0xff] %vm496, -inf
        %500 = vst.msk [vmem:[#allocation2 + $0x18] sm:$0xff] %vm496, -inf
        %501 = vst.msk [vmem:[#allocation2 + $0x20] sm:$0xff] %vm496, -inf
        %502 = vst.msk [vmem:[#allocation2 + $0x28] sm:$0xff] %vm496, -inf
        %503 = vst.msk [vmem:[#allocation2 + $0x30] sm:$0xff] %vm496, -inf
        %504 = vst.msk [vmem:[#allocation2 + $0x38] sm:$0xff] %vm496, -inf
        %505 = vst.msk [vmem:[#allocation3] sm:$0xff] %vm496, 0.0
        %506 = vst.msk [vmem:[#allocation3 + $0x8] sm:$0xff] %vm496, 0.0
        %507 = vst.msk [vmem:[#allocation3 + $0x10] sm:$0xff] %vm496, 0.0
        %508 = vst.msk [vmem:[#allocation3 + $0x18] sm:$0xff] %vm496, 0.0
        %509 = vst.msk [vmem:[#allocation3 + $0x20] sm:$0xff] %vm496, 0.0
        %510 = vst.msk [vmem:[#allocation3 + $0x28] sm:$0xff] %vm496, 0.0
        %511 = vst.msk [vmem:[#allocation3 + $0x30] sm:$0xff] %vm496, 0.0
        %512 = vst.msk [vmem:[#allocation3 + $0x38] sm:$0xff] %vm496, 0.0
        %513 = vst [vmem:[#allocation4] sm:$0xff] 0.0
        %514 = vst [vmem:[#allocation4 + $0x8] sm:$0xff] 0.0
        %515 = vst [vmem:[#allocation4 + $0x10] sm:$0xff] 0.0
        %516 = vst [vmem:[#allocation4 + $0x18] sm:$0xff] 0.0
        %517 = vst [vmem:[#allocation4 + $0x20] sm:$0xff] 0.0
        %518 = vst [vmem:[#allocation4 + $0x28] sm:$0xff] 0.0
        %519 = vst [vmem:[#allocation4 + $0x30] sm:$0xff] 0.0
        %520 = vst [vmem:[#allocation4 + $0x38] sm:$0xff] 0.0
      $region36: #{scaled_dot_attention.1} parent=31 // pred_fallthru
        _
      %v521 = vld [vmem:[#allocation2] sm:$0xff]
      %v522 = vld [vmem:[#allocation2 + $0x8] sm:$0xff]
      %v523 = vld [vmem:[#allocation2 + $0x10] sm:$0xff]
      %v524 = vld [vmem:[#allocation2 + $0x18] sm:$0xff]
      %v525 = vld [vmem:[#allocation2 + $0x20] sm:$0xff]
      %v526 = vld [vmem:[#allocation2 + $0x28] sm:$0xff]
      %v527 = vld [vmem:[#allocation2 + $0x30] sm:$0xff]
      %v528 = vld [vmem:[#allocation2 + $0x38] sm:$0xff]
      %529 = vmax.xlane.f32.xlu0 %v446
      %v530 = vpop.xlane.xlu0 %529
      %531 = vmax.xlane.f32.xlu0 %v449
      %v532 = vpop.xlane.xlu0 %531
      %533 = vmax.xlane.f32.xlu0 %v454
      %v534 = vpop.xlane.xlu0 %533
      %535 = vmax.xlane.f32.xlu0 %v457
      %v536 = vpop.xlane.xlu0 %535
      %537 = vmax.xlane.f32.xlu0 %v462
      %v538 = vpop.xlane.xlu0 %537
      %539 = vmax.xlane.f32.xlu0 %v465
      %v540 = vpop.xlane.xlu0 %539
      %541 = vmax.xlane.f32.xlu0 %v470
      %v542 = vpop.xlane.xlu0 %541
      %543 = vmax.xlane.f32.xlu0 %v473
      %v544 = vpop.xlane.xlu0 %543
      %v545 = vmax.f32 %v521, %v530
      %v546 = vmax.f32 %v522, %v532
      %v547 = vmax.f32 %v523, %v534
      %v548 = vmax.f32 %v524, %v536
      %v549 = vmax.f32 %v525, %v538
      %v550 = vmax.f32 %v526, %v540
      %v551 = vmax.f32 %v527, %v542
      %v552 = vmax.f32 %v528, %v544
      %v553 = vsub.f32 %v521, %v545
      %v554 = vsub.f32 %v522, %v546
      %v555 = vsub.f32 %v523, %v547
      %v556 = vsub.f32 %v524, %v548
      %v557 = vsub.f32 %v525, %v549
      %v558 = vsub.f32 %v526, %v550
      %v559 = vsub.f32 %v527, %v551
      %v560 = vsub.f32 %v528, %v552
      %v561 = vmul.f32 %v553, 1.442695
      %v562 = vpow.pop %v561
      %v563 = vmul.f32 %v554, 1.442695
      %v564 = vpow.pop %v563
      %v565 = vmul.f32 %v555, 1.442695
      %v566 = vpow.pop %v565
      %v567 = vmul.f32 %v556, 1.442695
      %v568 = vpow.pop %v567
      %v569 = vmul.f32 %v557, 1.442695
      %v570 = vpow.pop %v569
      %v571 = vmul.f32 %v558, 1.442695
      %v572 = vpow.pop %v571
      %v573 = vmul.f32 %v559, 1.442695
      %v574 = vpow.pop %v573
      %v575 = vmul.f32 %v560, 1.442695
      %v576 = vpow.pop %v575
      %578 = vset.pattern.permute.xlu0 0
      %579 = vperm.xlu0 %578, %v545
      %v580 = vpop.permute.xlu0 %579
      %583 = vset.pattern.permute.xlu0 0
      %584 = vperm.xlu0 %583, %v546
      %v585 = vpop.permute.xlu0 %584
      %588 = vset.pattern.permute.xlu0 0
      %589 = vperm.xlu0 %588, %v547
      %v590 = vpop.permute.xlu0 %589
      %593 = vset.pattern.permute.xlu0 0
      %594 = vperm.xlu0 %593, %v548
      %v595 = vpop.permute.xlu0 %594
      %598 = vset.pattern.permute.xlu0 0
      %599 = vperm.xlu0 %598, %v549
      %v600 = vpop.permute.xlu0 %599
      %603 = vset.pattern.permute.xlu0 0
      %604 = vperm.xlu0 %603, %v550
      %v605 = vpop.permute.xlu0 %604
      %608 = vset.pattern.permute.xlu0 0
      %609 = vperm.xlu0 %608, %v551
      %v610 = vpop.permute.xlu0 %609
      %613 = vset.pattern.permute.xlu0 0
      %614 = vperm.xlu0 %613, %v552
      %v615 = vpop.permute.xlu0 %614
      %v617 = vsub.f32 %v446, %v580
      %v618 = vsub.f32 %v449, %v585
      %v619 = vsub.f32 %v454, %v590
      %v620 = vsub.f32 %v457, %v595
      %v621 = vsub.f32 %v462, %v600
      %v622 = vsub.f32 %v465, %v605
      %v623 = vsub.f32 %v470, %v610
      %v624 = vsub.f32 %v473, %v615
      %v625 = vmul.f32 %v617, 1.442695
      %v626 = vpow.pop %v625
      %v627 = vmul.f32 %v618, 1.442695
      %v628 = vpow.pop %v627
      %v629 = vmul.f32 %v619, 1.442695
      %v630 = vpow.pop %v629
      %v631 = vmul.f32 %v620, 1.442695
      %v632 = vpow.pop %v631
      %v633 = vmul.f32 %v621, 1.442695
      %v634 = vpow.pop %v633
      %v635 = vmul.f32 %v622, 1.442695
      %v636 = vpow.pop %v635
      %v637 = vmul.f32 %v623, 1.442695
      %v638 = vpow.pop %v637
      %v639 = vmul.f32 %v624, 1.442695
      %v640 = vpow.pop %v639
      %v641 = vld [vmem:[#allocation3] sm:$0xff]
      %v642 = vld [vmem:[#allocation3 + $0x8] sm:$0xff]
      %v643 = vld [vmem:[#allocation3 + $0x10] sm:$0xff]
      %v644 = vld [vmem:[#allocation3 + $0x18] sm:$0xff]
      %v645 = vld [vmem:[#allocation3 + $0x20] sm:$0xff]
      %v646 = vld [vmem:[#allocation3 + $0x28] sm:$0xff]
      %v647 = vld [vmem:[#allocation3 + $0x30] sm:$0xff]
      %v648 = vld [vmem:[#allocation3 + $0x38] sm:$0xff]
      %v649 = vmul.f32 %v562, %v641
      %v650 = vmul.f32 %v564, %v642
      %v651 = vmul.f32 %v566, %v643
      %v652 = vmul.f32 %v568, %v644
      %v653 = vmul.f32 %v570, %v645
      %v654 = vmul.f32 %v572, %v646
      %v655 = vmul.f32 %v574, %v647
      %v656 = vmul.f32 %v576, %v648
      %657 = vadd.xlane.f32.xlu0 %v626
      %v658 = vpop.xlane.xlu0 %657
      %659 = vadd.xlane.f32.xlu0 %v628
      %v660 = vpop.xlane.xlu0 %659
      %661 = vadd.xlane.f32.xlu0 %v630
      %v662 = vpop.xlane.xlu0 %661
      %663 = vadd.xlane.f32.xlu0 %v632
      %v664 = vpop.xlane.xlu0 %663
      %665 = vadd.xlane.f32.xlu0 %v634
      %v666 = vpop.xlane.xlu0 %665
      %667 = vadd.xlane.f32.xlu0 %v636
      %v668 = vpop.xlane.xlu0 %667
      %669 = vadd.xlane.f32.xlu0 %v638
      %v670 = vpop.xlane.xlu0 %669
      %671 = vadd.xlane.f32.xlu0 %v640
      %v672 = vpop.xlane.xlu0 %671
      %v673 = vadd.f32 %v649, %v658
      %v674 = vadd.f32 %v650, %v660
      %v675 = vadd.f32 %v651, %v662
      %v676 = vadd.f32 %v652, %v664
      %v677 = vadd.f32 %v653, %v666
      %v678 = vadd.f32 %v654, %v668
      %v679 = vadd.f32 %v655, %v670
      %v680 = vadd.f32 %v656, %v672
      %vm681 = vcmask 7168
      %682 = vst.msk [vmem:[#allocation3] sm:$0xff] %vm681, %v673
      %683 = vst.msk [vmem:[#allocation3 + $0x8] sm:$0xff] %vm681, %v674
      %684 = vst.msk [vmem:[#allocation3 + $0x10] sm:$0xff] %vm681, %v675
      %685 = vst.msk [vmem:[#allocation3 + $0x18] sm:$0xff] %vm681, %v676
      %686 = vst.msk [vmem:[#allocation3 + $0x20] sm:$0xff] %vm681, %v677
      %687 = vst.msk [vmem:[#allocation3 + $0x28] sm:$0xff] %vm681, %v678
      %688 = vst.msk [vmem:[#allocation3 + $0x30] sm:$0xff] %vm681, %v679
      %689 = vst.msk [vmem:[#allocation3 + $0x38] sm:$0xff] %vm681, %v680
      %v690 = vld [vmem:[#allocation4] sm:$0xff]
      %v691 = vld [vmem:[#allocation4 + $0x8] sm:$0xff]
      %v692 = vld [vmem:[#allocation4 + $0x10] sm:$0xff]
      %v693 = vld [vmem:[#allocation4 + $0x18] sm:$0xff]
      %v694 = vld [vmem:[#allocation4 + $0x20] sm:$0xff]
      %v695 = vld [vmem:[#allocation4 + $0x28] sm:$0xff]
      %v696 = vld [vmem:[#allocation4 + $0x30] sm:$0xff]
      %v697 = vld [vmem:[#allocation4 + $0x38] sm:$0xff]
      %699 = vset.pattern.permute.xlu0 0
      %700 = vperm.xlu0 %699, %v562
      %v701 = vpop.permute.xlu0 %700
      %704 = vset.pattern.permute.xlu0 0
      %705 = vperm.xlu0 %704, %v564
      %v706 = vpop.permute.xlu0 %705
      %709 = vset.pattern.permute.xlu0 0
      %710 = vperm.xlu0 %709, %v566
      %v711 = vpop.permute.xlu0 %710
      %714 = vset.pattern.permute.xlu0 0
      %715 = vperm.xlu0 %714, %v568
      %v716 = vpop.permute.xlu0 %715
      %719 = vset.pattern.permute.xlu0 0
      %720 = vperm.xlu0 %719, %v570
      %v721 = vpop.permute.xlu0 %720
      %724 = vset.pattern.permute.xlu0 0
      %725 = vperm.xlu0 %724, %v572
      %v726 = vpop.permute.xlu0 %725
      %729 = vset.pattern.permute.xlu0 0
      %730 = vperm.xlu0 %729, %v574
      %v731 = vpop.permute.xlu0 %730
      %734 = vset.pattern.permute.xlu0 0
      %735 = vperm.xlu0 %734, %v576
      %v736 = vpop.permute.xlu0 %735
      %v738 = vmul.f32 %v701, %v690
      %v739 = vmul.f32 %v706, %v691
      %v740 = vmul.f32 %v711, %v692
      %v741 = vmul.f32 %v716, %v693
      %v742 = vmul.f32 %v721, %v694
      %v743 = vmul.f32 %v726, %v695
      %v744 = vmul.f32 %v731, %v696
      %v745 = vmul.f32 %v736, %v697
      %v746 = vpack.c.bf16 %v628, %v626
      %v747 = vpack.c.bf16 %v632, %v630
      %v748 = vpack.c.bf16 %v636, %v634
      %v749 = vpack.c.bf16 %v640, %v638
      %v766 = vunpack.c.l.b16 %v476
      %v767 = vunpack.c.l.b16 %v477
      %v768 = vunpack.c.l.b16 %v478
      %v769 = vunpack.c.l.b16 %v479
      %v770 = vunpack.c.l.b16 %v480
      %v771 = vunpack.c.l.b16 %v481
      %v772 = vunpack.c.l.b16 %v482
      %v773 = vunpack.c.l.b16 %v483
      %v774 = vunpack.c.l.b16 %v484
      %v775 = vunpack.c.l.b16 %v485
      %v776 = vunpack.c.l.b16 %v486
      %v777 = vunpack.c.l.b16 %v487
      %v778 = vunpack.c.l.b16 %v488
      %v779 = vunpack.c.l.b16 %v489
      %v780 = vunpack.c.l.b16 %v490
      %v781 = vunpack.c.l.b16 %v491
      %v782 = vpack.c.b16 %v767, %v766
      %v783 = vpack.c.b16 %v769, %v768
      %v784 = vpack.c.b16 %v771, %v770
      %v785 = vpack.c.b16 %v773, %v772
      %v786 = vpack.c.b16 %v775, %v774
      %v787 = vpack.c.b16 %v777, %v776
      %v788 = vpack.c.b16 %v779, %v778
      %v789 = vpack.c.b16 %v781, %v780
      %798 = vmatprep.subr.bf16.mxu0 0
      %799 = vmatpush1.bf16.msra.mxu0 %v789
      %800 = vmatprep.subr.bf16.mxu0 0
      %801 = vmatpush1.bf16.msra.mxu0 %v788
      %802 = vmatprep.subr.bf16.mxu0 0
      %803 = vmatpush1.bf16.msra.mxu0 %v787
      %804 = vmatprep.subr.bf16.mxu0 0
      %805 = vmatpush1.bf16.msra.mxu0 %v786
      %806 = vmatprep.subr.bf16.mxu0 0
      %807 = vmatpush1.bf16.msra.mxu0 %v785
      %808 = vmatprep.subr.bf16.mxu0 0
      %809 = vmatpush1.bf16.msra.mxu0 %v784
      %810 = vmatprep.subr.bf16.mxu0 0
      %811 = vmatpush1.bf16.msra.mxu0 %v783
      %812 = vmatprep.subr.bf16.mxu0 0
      %813 = vmatpush1.bf16.msra.mxu0 %v782
      %814 = vmatprep.subr.bf16.mxu0 0
      %815 = vmatpush2.bf16.msra.mxu0 0
      %816 = vmatprep.subr.bf16.mxu0 0
      %817 = vmatpush2.bf16.msra.mxu0 0
      %818 = vmatprep.subr.bf16.mxu0 0
      %819 = vmatpush2.bf16.msra.mxu0 0
      %820 = vmatprep.subr.bf16.mxu0 0
      %821 = vmatpush2.bf16.msra.mxu0 0
      %822 = vmatprep.subr.bf16.mxu0 0
      %823 = vmatpush2.bf16.msra.mxu0 0
      %824 = vmatprep.subr.bf16.mxu0 0
      %825 = vmatpush2.bf16.msra.mxu0 0
      %826 = vmatprep.subr.bf16.mxu0 0
      %827 = vmatpush2.bf16.msra.mxu0 0
      %828 = vmatprep.subr.bf16.mxu0 0
      %829 = vmatpush2.bf16.msra.mxu0 0
      %830 = vmatprep.mubr.bf16.mxu0 0
      %831 = vmatmul.mubr.bf16.gmra.mxu0 %v746
      %v832 = vpop.f32.mrf.mxu0
      %v833 = vadd.f32 0.0, %v832
      %v834 = vpop.f32.mrf.mxu0
      %v835 = vpop.f32.mrf.mxu0
      %v836 = vadd.f32 0.0, %v835
      %v837 = vpop.f32.mrf.mxu0
      %838 = vmatprep.mubr.bf16.mxu0 0
      %839 = vmatmul.mubr.bf16.gmra.mxu0 %v747
      %v840 = vpop.f32.mrf.mxu0
      %v841 = vadd.f32 0.0, %v840
      %v842 = vpop.f32.mrf.mxu0
      %v843 = vpop.f32.mrf.mxu0
      %v844 = vadd.f32 0.0, %v843
      %v845 = vpop.f32.mrf.mxu0
      %846 = vmatprep.mubr.bf16.mxu0 0
      %847 = vmatmul.mubr.bf16.gmra.mxu0 %v748
      %v848 = vpop.f32.mrf.mxu0
      %v849 = vadd.f32 0.0, %v848
      %v850 = vpop.f32.mrf.mxu0
      %v851 = vpop.f32.mrf.mxu0
      %v852 = vadd.f32 0.0, %v851
      %v853 = vpop.f32.mrf.mxu0
      %854 = vmatprep.mubr.bf16.mxu0 0
      %855 = vmatmul.mubr.bf16.gmra.mxu0 %v749
      %v856 = vpop.f32.mrf.mxu0
      %v857 = vadd.f32 0.0, %v856
      %v858 = vpop.f32.mrf.mxu0
      %v859 = vpop.f32.mrf.mxu0
      %v860 = vadd.f32 0.0, %v859
      %v861 = vpop.f32.mrf.mxu0
      %862 = vdwg.mxu0
      %v863 = vadd.f32 %v738, %v833
      %v864 = vadd.f32 %v739, %v836
      %v865 = vadd.f32 %v740, %v841
      %v866 = vadd.f32 %v741, %v844
      %v867 = vadd.f32 %v742, %v849
      %v868 = vadd.f32 %v743, %v852
      %v869 = vadd.f32 %v744, %v857
      %v870 = vadd.f32 %v745, %v860
      %871 = vst [vmem:[#allocation4] sm:$0xff] %v863
      %872 = vst [vmem:[#allocation4 + $0x8] sm:$0xff] %v864
      %873 = vst [vmem:[#allocation4 + $0x10] sm:$0xff] %v865
      %874 = vst [vmem:[#allocation4 + $0x18] sm:$0xff] %v866
      %875 = vst [vmem:[#allocation4 + $0x20] sm:$0xff] %v867
      %876 = vst [vmem:[#allocation4 + $0x28] sm:$0xff] %v868
      %877 = vst [vmem:[#allocation4 + $0x30] sm:$0xff] %v869
      %878 = vst [vmem:[#allocation4 + $0x38] sm:$0xff] %v870
      %879 = vst.msk [vmem:[#allocation2] sm:$0xff] %vm681, %v545
      %880 = vst.msk [vmem:[#allocation2 + $0x8] sm:$0xff] %vm681, %v546
      %881 = vst.msk [vmem:[#allocation2 + $0x10] sm:$0xff] %vm681, %v547
      %882 = vst.msk [vmem:[#allocation2 + $0x18] sm:$0xff] %vm681, %v548
      %883 = vst.msk [vmem:[#allocation2 + $0x20] sm:$0xff] %vm681, %v549
      %884 = vst.msk [vmem:[#allocation2 + $0x28] sm:$0xff] %vm681, %v550
      %885 = vst.msk [vmem:[#allocation2 + $0x30] sm:$0xff] %vm681, %v551
      %886 = vst.msk [vmem:[#allocation2 + $0x38] sm:$0xff] %vm681, %v552
      %p887 = scmp.eq.s32.totalorder %s21, 1
      // Predicated region
      $region37: #{scaled_dot_attention.1} parent=31 // pred_check
        %p888 = pneg %p887
      $region38: #{scaled_dot_attention.1} parent=31 // pred_check_branch
        %890 = sbr.rel (%p888) target = $region40
      $region39: #{scaled_dot_attention.1} parent=31 // pred_region
        %v891 = vld [vmem:[#allocation3] sm:$0xff]
        %v892 = vld [vmem:[#allocation3 + $0x8] sm:$0xff]
        %v893 = vld [vmem:[#allocation3 + $0x10] sm:$0xff]
        %v894 = vld [vmem:[#allocation3 + $0x18] sm:$0xff]
        %v895 = vld [vmem:[#allocation3 + $0x20] sm:$0xff]
        %v896 = vld [vmem:[#allocation3 + $0x28] sm:$0xff]
        %v897 = vld [vmem:[#allocation3 + $0x30] sm:$0xff]
        %v898 = vld [vmem:[#allocation3 + $0x38] sm:$0xff]
        %v899 = vrcp.pop %v891
        %v900 = vrcp.pop %v892
        %v901 = vrcp.pop %v893
        %v902 = vrcp.pop %v894
        %v903 = vrcp.pop %v895
        %v904 = vrcp.pop %v896
        %v905 = vrcp.pop %v897
        %v906 = vrcp.pop %v898
        %v907 = vld [vmem:[#allocation4] sm:$0xff]
        %v908 = vld [vmem:[#allocation4 + $0x8] sm:$0xff]
        %v909 = vld [vmem:[#allocation4 + $0x10] sm:$0xff]
        %v910 = vld [vmem:[#allocation4 + $0x18] sm:$0xff]
        %v911 = vld [vmem:[#allocation4 + $0x20] sm:$0xff]
        %v912 = vld [vmem:[#allocation4 + $0x28] sm:$0xff]
        %v913 = vld [vmem:[#allocation4 + $0x30] sm:$0xff]
        %v914 = vld [vmem:[#allocation4 + $0x38] sm:$0xff]
        %916 = vset.pattern.permute.xlu0 0
        %917 = vperm.xlu0 %916, %v899
        %v918 = vpop.permute.xlu0 %917
        %921 = vset.pattern.permute.xlu0 0
        %922 = vperm.xlu0 %921, %v900
        %v923 = vpop.permute.xlu0 %922
        %926 = vset.pattern.permute.xlu0 0
        %927 = vperm.xlu0 %926, %v901
        %v928 = vpop.permute.xlu0 %927
        %931 = vset.pattern.permute.xlu0 0
        %932 = vperm.xlu0 %931, %v902
        %v933 = vpop.permute.xlu0 %932
        %936 = vset.pattern.permute.xlu0 0
        %937 = vperm.xlu0 %936, %v903
        %v938 = vpop.permute.xlu0 %937
        %941 = vset.pattern.permute.xlu0 0
        %942 = vperm.xlu0 %941, %v904
        %v943 = vpop.permute.xlu0 %942
        %946 = vset.pattern.permute.xlu0 0
        %947 = vperm.xlu0 %946, %v905
        %v948 = vpop.permute.xlu0 %947
        %951 = vset.pattern.permute.xlu0 0
        %952 = vperm.xlu0 %951, %v906
        %v953 = vpop.permute.xlu0 %952
        %v955 = vmul.f32 %v907, %v918
        %v956 = vmul.f32 %v908, %v923
        %v957 = vmul.f32 %v909, %v928
        %v958 = vmul.f32 %v910, %v933
        %v959 = vmul.f32 %v911, %v938
        %v960 = vmul.f32 %v912, %v943
        %v961 = vmul.f32 %v913, %v948
        %v962 = vmul.f32 %v914, %v953
        %963 = vst [vmem:[%s287] sm:$0xff] %v955
        %964 = vst [vmem:[%s287 + $0x8] sm:$0xff] %v956
        %965 = vst [vmem:[%s287 + $0x10] sm:$0xff] %v957
        %966 = vst [vmem:[%s287 + $0x18] sm:$0xff] %v958
        %967 = vst [vmem:[%s287 + $0x20] sm:$0xff] %v959
        %968 = vst [vmem:[%s287 + $0x28] sm:$0xff] %v960
        %969 = vst [vmem:[%s287 + $0x30] sm:$0xff] %v961
        %970 = vst [vmem:[%s287 + $0x38] sm:$0xff] %v962
      $region40: #{scaled_dot_attention.1} parent=31 // pred_fallthru
        _
      %s971 = smul.u32 8, %s20
      %p972 = scmp.lt.s32.totalorder %s19, 0
      %s973 = scalar_select %p972, %s19, 0
      %p974 = scmp.lt.s32.totalorder %s971, 15
      %s975 = scalar_select %p974, %s971, 15
      %s976 = smul.addr %s973, 16
      %s977 = sadd.s32 %s975, %s976
      %s978 = smul.addr %s977, 8
      %s979 = scalar_lea.vmem %s3, %s978
      // Predicated region
      $region41: #{scaled_dot_attention.1} parent=31 // pred_check
        %p980 = pneg %p137
      $region42: #{scaled_dot_attention.1} parent=31 // pred_check_branch
        %982 = sbr.rel (%p980) target = $region44
      $region43: #{scaled_dot_attention.1} parent=31 // pred_region
        %s983 = smul.u32 8, %s20
      $region44: #{scaled_dot_attention.1} parent=31 // pred_fallthru
        _
    $region32: #{scaled_dot_attention.1} parent=5 // pred_fallthru
      _
    %p984 = scmp.le.s32.totalorder 2, %s9
    // Predicated region
    $region45: #{scaled_dot_attention.1} parent=5 // pred_check
      %p985 = pneg %p984
    $region46: #{scaled_dot_attention.1} parent=5 // pred_check_branch
      %987 = sbr.rel (%p985) target = $region48
    $region47: #{scaled_dot_attention.1} parent=5 // pred_region
      %s988 = ssub.s32 %s9, 2
      // Predicated region
      $region49: #{scaled_dot_attention.1} parent=47 // pred_check
        %p989 = pneg %p143
      $region50: #{scaled_dot_attention.1} parent=47 // pred_check_branch
        %991 = sbr.rel (%p989) target = $region52
      $region51: #{scaled_dot_attention.1} parent=47 // pred_region
        %s992 = smul.u32 8, %s23
        %p993 = scmp.lt.s32.totalorder %s22, 0
        %s994 = scalar_select %p993, %s22, 0
        %p995 = scmp.lt.s32.totalorder %s992, 15
        %s996 = scalar_select %p995, %s992, 15
        %s997 = smul.addr %s994, 16
        %s998 = sadd.s32 %s996, %s997
        %s999 = smul.addr %s998, 8
        %s1000 = scalar_lea.vmem %s3, %s999
      $region52: #{scaled_dot_attention.1} parent=47 // pred_fallthru
        _
    $region48: #{scaled_dot_attention.1} parent=5 // pred_fallthru
      _
  $region6: #{scaled_dot_attention.1} parent=0 // loop_footer
    %s13 = sadd.s32 1, %s9
  $region7: #{scaled_dot_attention.1} parent=0 // loop_footer_branch
    %8 = sbr.rel target = $region3
  $region8: #{scaled_dot_attention.1} parent=0 // loop_exit
    _

</llo_original>
